<compile_context>
chip_gen: v7x
topology: tpu7x:2x2x1
jax: 0.10.0
libtpu: 0.0.40
codegen_flags: <defaults>
</compile_context>

<pallas_src>
import jax
import jax.numpy as jnp
from jax.experimental import pallas as pl
from jax.experimental.pallas import tpu as pltpu


def _tfe_kernel(x_ref, w_ref, o_ref):
    # x_ref: (TM, d_inp), w_ref: (d_inp, d_model), o_ref: (TM, d_model)
    o_ref[...] = jnp.dot(
        x_ref[...], w_ref[...], preferred_element_type=jnp.float32
    ).astype(o_ref.dtype)


def _round_up(v, m):
    return ((v + m - 1) // m) * m


def _pick_row_tile(M, d_inp, d_model, itemsize):
    """Largest row tile whose double-buffered working set fits a safe budget."""
    # Working set: 2x output tile + 2x input tile (double-buffered) + weight.
    # ~12 MiB fits v5e's 16 MiB scoped default and leaves headroom on v6e/v7x.
    budget = 12 * 1024 * 1024
    per_row = 2 * (d_model + d_inp) * itemsize
    weight_bytes = d_inp * d_model * itemsize
    tm = max(8, (budget - weight_bytes) // max(per_row, 1))
    tm = (tm // 8) * 8
    # Keep at least 2 grid steps so v7x's two TensorCores both get work.
    if M > 8:
        tm = min(tm, _round_up(pl.cdiv(M, 2), 8))
    # Never exceed the (padded-to-8) row count.
    tm = min(tm, _round_up(M, 8))
    return max(tm, 8)


def time_feature_embedding(x: jax.Array, weight: jax.Array) -> jax.Array:
    """out = x @ weight.T  (bias-free Linear).  x: (B, L, d_inp), weight: (d_model, d_inp)."""
    B, L, d_inp = x.shape
    d_model, d_inp_w = weight.shape
    assert d_inp_w == d_inp, "weight / input feature mismatch"

    M = B * L
    x2 = x.reshape(M, d_inp)
    w_t = jnp.transpose(weight).astype(x.dtype)  # (d_inp, d_model)

    tm = _pick_row_tile(M, d_inp, d_model, jnp.dtype(x.dtype).itemsize)
    grid_m = pl.cdiv(M, tm)  # ragged last block: OOB rows clipped on writeback

    out = pl.pallas_call(
        _tfe_kernel,
        out_shape=jax.ShapeDtypeStruct((M, d_model), x.dtype),
        grid_spec=pltpu.PrefetchScalarGridSpec(
            num_scalar_prefetch=0,
            grid=(grid_m,),
            in_specs=[
                pl.BlockSpec((tm, d_inp), lambda i: (i, 0)),       # row tile of x
                pl.BlockSpec((d_inp, d_model), lambda i: (0, 0)),  # full weight, reused
            ],
            out_specs=pl.BlockSpec((tm, d_model), lambda i: (i, 0)),
        ),
        compiler_params=pltpu.CompilerParams(
            dimension_semantics=("parallel",),
        ),
    )(x2, w_t)

    return out.reshape(B, L, d_model)


if __name__ == "__main__":
    key = jax.random.PRNGKey(0)
    kx, kw = jax.random.split(key)

    # freq='h' -> d_inp = 4 (per TimeFeatureEmbedding freq_map); small test shapes.
    B, L, d_inp, d_model = 2, 8, 4, 32
    x = jax.random.normal(kx, (B, L, d_inp), dtype=jnp.float32)
    # nn.Linear weight layout: (d_model, d_inp)
    bound = 1.0 / (d_inp ** 0.5)
    weight = jax.random.uniform(
        kw, (d_model, d_inp), dtype=jnp.float32, minval=-bound, maxval=bound
    )

    out = time_feature_embedding(x, weight)
    out = jax.block_until_ready(out)

    # Reference: bias-free linear, out = x @ W.T
    ref = jnp.einsum("bld,md->blm", x, weight)
    assert out.shape == (B, L, d_model)
    assert jnp.allclose(out, ref, atol=1e-5, rtol=1e-5), "mismatch vs reference"

    print("KERNEL_OK")
</pallas_src>

<mosaic_0001>
module attributes {stable_mosaic.version = 11 : i64} {
  func.func @_tfe_kernel(%arg0: i32, %arg1: memref<8x4xf32, #tpu.memory_space<vmem>>, %arg2: memref<4x32xf32, #tpu.memory_space<vmem>>, %arg3: memref<8x32xf32, #tpu.memory_space<vmem>>) attributes {dimension_semantics = [#tpu.dimension_semantics<parallel>], iteration_bounds = array<i64: 2>, scalar_prefetch = 0 : i64, scratch_operands = 0 : i64, tpu.core_type = #tpu.core_type<tc>, window_params = [{transform_indices = @transform_0, window_bounds = array<i64: 8, 4>}, {pipeline_mode = #tpu.pipeline_mode<synchronous>, transform_indices = @transform_1, window_bounds = array<i64: 4, 32>}, {transform_indices = @transform_2, window_bounds = array<i64: 8, 32>}]} {
    %c0 = arith.constant 0 : index
    %c0_0 = arith.constant 0 : index
    %0 = vector.load %arg1[%c0, %c0_0] : memref<8x4xf32, #tpu.memory_space<vmem>>, vector<8x4xf32>
    %c0_1 = arith.constant 0 : index
    %c0_2 = arith.constant 0 : index
    %1 = vector.load %arg2[%c0_1, %c0_2] : memref<4x32xf32, #tpu.memory_space<vmem>>, vector<4x32xf32>
    %cst = arith.constant dense<0.000000e+00> : vector<8x32xf32>
    %2 = tpu.matmul %0, %1, %cst {dimension_numbers = #tpu.dot_dimension_numbers<[1], [0], [0], [1], [0, 0, 1, 1], [], []>} : vector<8x4xf32>, vector<4x32xf32>, vector<8x32xf32> -> vector<8x32xf32>
    %c0_3 = arith.constant 0 : index
    %c0_4 = arith.constant 0 : index
    %3 = vector.load %arg3[%c0_3, %c0_4] : memref<8x32xf32, #tpu.memory_space<vmem>>, vector<8x32xf32>
    tpu.vector_store %arg3[%c0_3, %c0_4], %2 {strides = array<i32>} : memref<8x32xf32, #tpu.memory_space<vmem>>, vector<8x32xf32>,
    return
  }
  func.func @transform_0(%arg0: i32) -> (i32, i32) {
    %c0_i32 = arith.constant 0 : i32
    %c0_i32_0 = arith.constant 0 : i32
    return %arg0, %c0_i32 : i32, i32
  }
  func.func @transform_1(%arg0: i32) -> (i32, i32) {
    %c0_i32 = arith.constant 0 : i32
    %c0_i32_0 = arith.constant 0 : i32
    %c0_i32_1 = arith.constant 0 : i32
    return %c0_i32, %c0_i32_0 : i32, i32
  }
  func.func @transform_2(%arg0: i32) -> (i32, i32) {
    %c0_i32 = arith.constant 0 : i32
    %c0_i32_0 = arith.constant 0 : i32
    return %arg0, %c0_i32 : i32, i32
  }
}

</mosaic_0001>

<llo_original>
// kernel: tpu_custom_call.1
$region0: #{tpu_custom_call.1}
  #allocation0 [shape = 'u32[]', space=smem, size = 0x4, offset = 0x4, fixed_abs, tag = 'smem constant byte address 0x4 - core index']
  #allocation1 [shape = 'u32[144,128]{1,0:T(1,128)}', space=vmem, size = 0x12000, scoped, tag = 'internal scratch']
  %s0 = inlined_call_operand.vmem [shape: f32[16,4], index: 0, kind: input, shape index: {}]
  %s1 = inlined_call_operand.vmem [shape: f32[4,32], index: 1, kind: input, shape index: {}]
  %s2 = inlined_call_operand.hbm [shape: f32[16,32], index: 2, kind: output, shape index: {}]
  %s3 = sld [smem:[#allocation0]]
  $region41: #{tpu_custom_call.1} parent=0
    _
  %s5 = ssub.s32 1, %s3
  %s6 = scalar_select 0, %s5, %s3
  $region1: #{tpu_custom_call.1} parent=0
    #allocation2 [shape = 'u8[8192]{0}', space=vmem, size = 0x2000, scoped, tag = 'output window, operand 0']
    #allocation3 [shape = 's32[2]{0}', space=sflag, size = 0x8, scoped, tag = 'scoped memory for tpu_custom_call.1']
    %7 = vsyncpa [#allocation3], 0
    %s8 = scalar_lea.sflag [#allocation3], 1
    %9 = vsyncpa %s8, 0
    loop: start=0, step=1, limit=4
    $region2: #{tpu_custom_call.1} parent=1 // loop_pre_header
      _
    $region3: #{tpu_custom_call.1} parent=1 // loop_header
      %s11 = sphi 0, %s15
      %p12 = scmp.ge.s32.totalorder %s11, 4
      %s21 = sphi 0, %s23
      %s24 = sphi 0, %s21
      %s25 = sphi 0, %s24
      %s41 = sphi 0, %s25
      %s45 = sphi 0, %s45
      %s47 = sphi 0, %s45
      %s48 = sphi 0, %s47
      %s62 = sphi 0, %s48
      %s68 = sphi 0, %s70
      %s71 = sphi 0, %s68
      %s72 = sphi 0, %s71
      %s88 = sphi 0, %s72
    $region4: #{tpu_custom_call.1} parent=1 // loop_header_branch
      %14 = sbr.rel (%p12) target = $region8
    $region5: #{tpu_custom_call.1} parent=1 // loop_body
      %s16 = ssub.s32 %s11, 1
      %s17 = ssub.s32 %s11, 2
      %s18 = sadd.s32 %s11, 1
      %s19 = ssub.s32 %s11, %s18
      %p20 = scmp.eq.s32.totalorder %s19, 0
      %s22 = sadd.s32 %s21, 1
      %s23 = scalar_select %p20, %s21, %s22
      %p26 = pneg %p20
      %p27 = scmp.eq.s32.totalorder %s11, 1
      %p28 = por %p26, %p27
      %p29 = scmp.ne.s32.totalorder %s21, %s24
      %p30 = scmp.eq.s32.totalorder %s11, 0
      %p31 = por %p29, %p30
      %p32 = scmp.ne.s32.totalorder %s21, %s24
      %p33 = scmp.eq.s32.totalorder %s16, 1
      %p34 = por %p32, %p33
      %p35 = scmp.ne.s32.totalorder %s24, %s25
      %p36 = scmp.eq.s32.totalorder %s16, 0
      %p37 = por %p35, %p36
      %p38 = scmp.ne.s32.totalorder %s24, %s25
      %p39 = scmp.eq.s32.totalorder %s17, 1
      %p40 = por %p38, %p39
      %p42 = scmp.ne.s32.totalorder %s25, %s41
      %p43 = scmp.eq.s32.totalorder %s17, 0
      %p44 = por %p42, %p43
      %s46 = sadd.s32 %s45, 1
      %p49 = scmp.eq.s32.totalorder %s11, 1
      %p50 = scmp.ne.s32.totalorder %s45, %s47
      %p51 = scmp.eq.s32.totalorder %s11, 0
      %p52 = por %p50, %p51
      %p53 = scmp.ne.s32.totalorder %s45, %s47
      %p54 = scmp.eq.s32.totalorder %s16, 1
      %p55 = por %p53, %p54
      %p56 = scmp.ne.s32.totalorder %s47, %s48
      %p57 = scmp.eq.s32.totalorder %s16, 0
      %p58 = por %p56, %p57
      %p59 = scmp.ne.s32.totalorder %s47, %s48
      %p60 = scmp.eq.s32.totalorder %s17, 1
      %p61 = por %p59, %p60
      %p63 = scmp.ne.s32.totalorder %s48, %s62
      %p64 = scmp.eq.s32.totalorder %s17, 0
      %p65 = por %p63, %p64
      %s66 = ssub.s32 %s11, %s18
      %p67 = scmp.eq.s32.totalorder %s66, 0
      %s69 = sadd.s32 %s68, 1
      %s70 = scalar_select %p67, %s68, %s69
      %p73 = pneg %p67
      %p74 = scmp.eq.s32.totalorder %s11, 1
      %p75 = por %p73, %p74
      %p76 = scmp.ne.s32.totalorder %s68, %s71
      %p77 = scmp.eq.s32.totalorder %s11, 0
      %p78 = por %p76, %p77
      %p79 = scmp.ne.s32.totalorder %s68, %s71
      %p80 = scmp.eq.s32.totalorder %s16, 1
      %p81 = por %p79, %p80
      %p82 = scmp.ne.s32.totalorder %s71, %s72
      %p83 = scmp.eq.s32.totalorder %s16, 0
      %p84 = por %p82, %p83
      %p85 = scmp.ne.s32.totalorder %s71, %s72
      %p86 = scmp.eq.s32.totalorder %s17, 1
      %p87 = por %p85, %p86
      %p89 = scmp.ne.s32.totalorder %s72, %s88
      %p90 = scmp.eq.s32.totalorder %s17, 0
      %p91 = por %p89, %p90
      %p92 = scmp.le.s32.totalorder 1, %s11
      %p93 = scmp.lt.s32.totalorder %s11, 3
      %p94 = pnand %p92, %p93
      %p95 = pneg %p94
      // Predicated region
      $region9: #{tpu_custom_call.1} parent=5 // pred_check
        _
      $region10: #{tpu_custom_call.1} parent=5 // pred_check_branch
        %97 = sbr.rel (%p94) target = $region12
      $region11: #{tpu_custom_call.1} parent=5 // pred_region
        %s98 = ssub.s32 %s11, 1
        // Predicated region
        $region13: #{tpu_custom_call.1} parent=11 // pred_check
          %p99 = pneg %p58
        $region14: #{tpu_custom_call.1} parent=11 // pred_check_branch
          %101 = sbr.rel (%p99) target = $region16
        $region15: #{tpu_custom_call.1} parent=11 // pred_region
          _
        $region16: #{tpu_custom_call.1} parent=11 // pred_fallthru
          _
      $region12: #{tpu_custom_call.1} parent=5 // pred_fallthru
        _
      %p102 = scmp.lt.s32.totalorder %s11, 2
      // Predicated region
      $region17: #{tpu_custom_call.1} parent=5 // pred_check
        %p103 = pneg %p102
      $region18: #{tpu_custom_call.1} parent=5 // pred_check_branch
        %105 = sbr.rel (%p103) target = $region20
      $region19: #{tpu_custom_call.1} parent=5 // pred_region
        // Predicated region
        $region21: #{tpu_custom_call.1} parent=19 // pred_check
          %p106 = pneg %p31
        $region22: #{tpu_custom_call.1} parent=19 // pred_check_branch
          %108 = sbr.rel (%p106) target = $region24
        $region23: #{tpu_custom_call.1} parent=19 // pred_region
          %p109 = scmp.lt.s32.totalorder %s11, 1
          %s110 = scalar_select %p109, %s11, 1
          %s111 = smul.addr %s110, 8
          %s112 = scalar_lea.vmem %s0, %s111
        $region24: #{tpu_custom_call.1} parent=19 // pred_fallthru
          _
      $region20: #{tpu_custom_call.1} parent=5 // pred_fallthru
        _
      %p113 = scmp.le.s32.totalorder 1, %s11
      %p114 = scmp.lt.s32.totalorder %s11, 3
      %p115 = pnand %p113, %p114
      %p116 = pneg %p115
      // Predicated region
      $region25: #{tpu_custom_call.1} parent=5 // pred_check
        _
      $region26: #{tpu_custom_call.1} parent=5 // pred_check_branch
        %118 = sbr.rel (%p115) target = $region28
      $region27: #{tpu_custom_call.1} parent=5 // pred_region
        %s119 = ssub.s32 %s11, 1
        %p120 = scmp.lt.s32.totalorder %s16, 1
        %s121 = scalar_select %p120, %s16, 1
        %s122 = smul.addr %s121, 8
        %s123 = scalar_lea.vmem %s0, %s122
        %p124 = pneg %p37
        %p125 = pneg %p34
        %p126 = pneg %p58
        %p127 = pneg %p55
        %p128 = pneg %p84
        %p129 = pneg %p81
        %s130 = sand.u32 %s71, 1
        %s131 = scalar_lea.sflag [#allocation3], %s130
        %s132 = sand.u32 %s71, 1
        %s133 = smul.addr %s132, 8
        %s134 = scalar_lea.vmem [#allocation2], %s133
        %p135 = scmp.lt.s32.totalorder %s16, 1
        %s136 = scalar_select %p135, %s16, 1
        %s137 = smul.addr %s136, 8
        %s138 = scalar_lea.vmem %s0, %s137
        %v139 = vld [vmem:[%s138] sm:$0xff]
        %v140 = vld [vmem:[%s1] sm:$0xf]
        %vm141 = vcmask 31744
        %v143 = vsel %vm141, %v139, 0
        %vm145 = vcmask 1043456
        %v147 = vsel %vm145, %v140, 0
        %149 = vmatprep.subr.mxu0 0.0
        %150 = vmatpush1.msra.mxu0 %v147
        %151 = vmatprep.subr.mxu0 0.0
        %152 = vmatpush1.msra.mxu0 0.0
        %153 = vmatprep.subr.mxu0 0.0
        %154 = vmatpush1.msra.mxu0 0.0
        %155 = vmatprep.subr.mxu0 0.0
        %156 = vmatpush1.msra.mxu0 0.0
        %157 = vmatprep.subr.mxu0 0.0
        %158 = vmatpush1.msra.mxu0 0.0
        %159 = vmatprep.subr.mxu0 0.0
        %160 = vmatpush1.msra.mxu0 0.0
        %161 = vmatprep.subr.mxu0 0.0
        %162 = vmatpush1.msra.mxu0 0.0
        %163 = vmatprep.subr.mxu0 0.0
        %164 = vmatpush1.msra.mxu0 0.0
        %165 = vmatprep.subr.mxu0 0.0
        %166 = vmatpush1.msra.mxu0 0.0
        %167 = vmatprep.subr.mxu0 0.0
        %168 = vmatpush1.msra.mxu0 0.0
        %169 = vmatprep.subr.mxu0 0.0
        %170 = vmatpush1.msra.mxu0 0.0
        %171 = vmatprep.subr.mxu0 0.0
        %172 = vmatpush1.msra.mxu0 0.0
        %173 = vmatprep.subr.mxu0 0.0
        %174 = vmatpush1.msra.mxu0 0.0
        %175 = vmatprep.subr.mxu0 0.0
        %176 = vmatpush1.msra.mxu0 0.0
        %177 = vmatprep.subr.mxu0 0.0
        %178 = vmatpush1.msra.mxu0 0.0
        %179 = vmatprep.subr.mxu0 0.0
        %180 = vmatpush1.msra.mxu0 0.0
        %181 = vmatprep.subr.mxu0 0.0
        %182 = vmatpush1.msra.mxu0 0.0
        %183 = vmatprep.subr.mxu0 0.0
        %184 = vmatpush1.msra.mxu0 0.0
        %185 = vmatprep.subr.mxu0 0.0
        %186 = vmatpush1.msra.mxu0 0.0
        %187 = vmatprep.subr.mxu0 0.0
        %188 = vmatpush1.msra.mxu0 0.0
        %189 = vmatprep.subr.mxu0 0.0
        %190 = vmatpush1.msra.mxu0 0.0
        %191 = vmatprep.subr.mxu0 0.0
        %192 = vmatpush1.msra.mxu0 0.0
        %193 = vmatprep.subr.mxu0 0.0
        %194 = vmatpush1.msra.mxu0 0.0
        %195 = vmatprep.subr.mxu0 0.0
        %196 = vmatpush1.msra.mxu0 0.0
        %197 = vmatprep.subr.mxu0 0.0
        %198 = vmatpush1.msra.mxu0 0.0
        %199 = vmatprep.subr.mxu0 0.0
        %200 = vmatpush1.msra.mxu0 0.0
        %201 = vmatprep.subr.mxu0 0.0
        %202 = vmatpush1.msra.mxu0 0.0
        %203 = vmatprep.subr.mxu0 0.0
        %204 = vmatpush1.msra.mxu0 0.0
        %205 = vmatprep.subr.mxu0 0.0
        %206 = vmatpush1.msra.mxu0 0.0
        %207 = vmatprep.subr.mxu0 0.0
        %208 = vmatpush1.msra.mxu0 0.0
        %209 = vmatprep.subr.mxu0 0.0
        %210 = vmatpush1.msra.mxu0 0.0
        %211 = vmatprep.subr.mxu0 0.0
        %212 = vmatpush1.msra.mxu0 0.0
        %213 = vmatprep.mubr.f32.mxu0 0.0
        %214 = vmatmul.mubr.f32.gmra.mrb[0].mxu0 %v143
        %v215 = vpop.f32.mrb[0].mxu0
        %v216 = vadd.f32 0.0, %v215
        %v217 = vpop.f32.mrb[0].mxu0
        %218 = vdwg.mxu0
        %vm219 = vcmask 261120
        %220 = vst.msk [vmem:[%s134] sm:$0xff] %vm219, %v216
        %s221 = sand.u32 %s71, 1
        %s222 = scalar_lea.sflag [#allocation3], %s221
        %s223 = sand.u32 %s71, 1
        %s224 = smul.addr %s223, 8
        %s225 = scalar_lea.vmem [#allocation2], %s224
        // Predicated region
        $region29: #{tpu_custom_call.1} parent=27 // pred_check
          %p226 = pneg %p81
        $region30: #{tpu_custom_call.1} parent=27 // pred_check_branch
          %228 = sbr.rel (%p226) target = $region32
        $region31: #{tpu_custom_call.1} parent=27 // pred_region
          %s230 = ssub.s32 128, 128
          %231 = vsyncadd %s222, %s230
          %s232 = smul.addr %s16, 128
          %s233 = scalar_lea.hbm %s2, %s232
          %s235 = sshll.u32 %s225, 4
          %s236 = int_to_ptr.vmem [resolvable:$true] %s235
          %238 = dma.vmem_to_hbm [thread:$0]  %s236, 128, %s233, %s222
        $region32: #{tpu_custom_call.1} parent=27 // pred_fallthru
          _
      $region28: #{tpu_custom_call.1} parent=5 // pred_fallthru
        _
      %p239 = scmp.le.s32.totalorder 2, %s11
      // Predicated region
      $region33: #{tpu_custom_call.1} parent=5 // pred_check
        %p240 = pneg %p239
      $region34: #{tpu_custom_call.1} parent=5 // pred_check_branch
        %242 = sbr.rel (%p240) target = $region36
      $region35: #{tpu_custom_call.1} parent=5 // pred_region
        %s243 = ssub.s32 %s11, 2
        // Predicated region
        $region37: #{tpu_custom_call.1} parent=35 // pred_check
          %p244 = pneg %p87
        $region38: #{tpu_custom_call.1} parent=35 // pred_check_branch
          %246 = sbr.rel (%p244) target = $region40
        $region39: #{tpu_custom_call.1} parent=35 // pred_region
          %s247 = sand.u32 %s72, 1
          %s248 = scalar_lea.sflag [#allocation3], %s247
          %s249 = sand.u32 %s72, 1
          %s250 = smul.addr %s249, 8
          %s251 = scalar_lea.vmem [#allocation2], %s250
          %252 = dma.done %s248, 128
        $region40: #{tpu_custom_call.1} parent=35 // pred_fallthru
          _
      $region36: #{tpu_custom_call.1} parent=5 // pred_fallthru
        _
    $region6: #{tpu_custom_call.1} parent=1 // loop_footer
      %s15 = sadd.s32 1, %s11
    $region7: #{tpu_custom_call.1} parent=1 // loop_footer_branch
      %10 = sbr.rel target = $region3
    $region8: #{tpu_custom_call.1} parent=1 // loop_exit
      _
    %253 = vsyncpa [#allocation3], 1
    %s254 = scalar_lea.sflag [#allocation3], 1
    %255 = vsyncpa %s254, 1

</llo_original>
